<compile_context>
chip_gen: v5e
topology: v5e:2x2
jax: 0.10.0
libtpu: 0.0.40
codegen_flags: <defaults>
</compile_context>

<pallas_src>
import functools

import jax
import jax.numpy as jnp
from jax.experimental import pallas as pl
from jax.experimental.pallas import tpu as pltpu


# --------------------------------------------------------------------------- #
# Tiling / VMEM helpers
# --------------------------------------------------------------------------- #

def _min_sublane_multiple(itemsize: int) -> int:
    # bf16 packs 2 rows per sublane, int8/fp8 pack 4 -> dtype-aware tile granularity.
    return {4: 8, 2: 16, 1: 32}.get(itemsize, 8)


def _pick_tile(n: int, target: int, itemsize: int) -> int:
    """Largest divisor of n that is <= target and a multiple of the sublane packing."""
    mm = _min_sublane_multiple(itemsize)
    if n <= target:
        return n
    for t in range(target, mm - 1, -1):
        if n % t == 0 and t % mm == 0:
            return t
    # TODO(synk): pad-and-mask awkward N/M instead of falling back to the full dim.
    return n


def _vmem_capacity_bytes() -> int:
    """Physical VMEM of the current chip; conservative v7x (64 MiB) fallback."""
    try:
        return int(pltpu.get_tpu_info().vmem_capacity_bytes)
    except Exception:
        return 64 * 1024 * 1024


def _flash_vmem_estimate(tq: int, tkv: int, c: int, h: int, dh: int, itemsize: int) -> int:
    """Rough per-step VMEM footprint of the flash kernel (double-buffered blocks +
    resident weights + scratch + online-softmax transients)."""
    f32 = 4
    dbl = 2  # pipeline double-buffering of blocked inputs / outputs
    io_blocks = dbl * itemsize * (2 * tq * c + 2 * h * tkv * dh)   # x, out, K, V blocks
    weights = dbl * (itemsize * 2 * c * c + f32 * c)               # W_q, W_proj, b_proj
    scratch = itemsize * (h * tq * dh + tq * c) + f32 * (h * tq * dh + 2 * h * tq)
    transient = f32 * 4 * h * tq * tkv                             # s, p, exp temporaries
    return io_blocks + weights + scratch + transient


# --------------------------------------------------------------------------- #
# Kernel 1: K/V projection into head-major (B, H, M, Dh)
# --------------------------------------------------------------------------- #

def _kv_proj_kernel(x_ref, wkv_ref, k_ref, v_ref, *, num_heads: int, head_dim: int):
    c = x_ref.shape[2]
    # One full-width MXU matmul; the per-head lane slices run once per element here
    # (projection pass) and never inside the flash inner loop.
    kv = jnp.dot(x_ref[0], wkv_ref[...], preferred_element_type=jnp.float32)  # (TN, 2C)
    for h in range(num_heads):
        lo = h * head_dim
        k_ref[0, h] = kv[:, lo:lo + head_dim].astype(k_ref.dtype)
        v_ref[0, h] = kv[:, c + lo:c + lo + head_dim].astype(v_ref.dtype)


# --------------------------------------------------------------------------- #
# Kernel 2: flash attention with fused Q projection and output projection
# --------------------------------------------------------------------------- #

def _flash_attn_kernel(xq_ref, k_ref, v_ref, wq_ref, wproj_ref, bproj_ref, o_ref,
                       q_scr, ctx_scr, m_scr, l_scr, acc_scr,
                       *, num_heads: int, head_dim: int, is_causal: bool):
    tq = xq_ref.shape[1]
    tkv = k_ref.shape[2]
    cdt = q_scr.dtype

    qi = pl.program_id(1)
    ki = pl.program_id(2)
    nk = pl.num_programs(2)

    @pl.when(ki == 0)
    def _init():
        # Fused Q projection (1/sqrt(Dh) already folded into W_q).  Park the (TQ, C)
        # result in VMEM scratch before the per-head split to bound its live range.
        q_full = jnp.dot(xq_ref[0], wq_ref[...], preferred_element_type=jnp.float32)
        ctx_scr[...] = q_full.astype(cdt)
        for h in range(num_heads):
            lo = h * head_dim
            q_scr[h] = ctx_scr[:, lo:lo + head_dim]
        m_scr[...] = jnp.full(m_scr.shape, -jnp.inf, dtype=m_scr.dtype)
        l_scr[...] = jnp.zeros(l_scr.shape, dtype=l_scr.dtype)
        acc_scr[...] = jnp.zeros(acc_scr.shape, dtype=acc_scr.dtype)

    def _step(apply_mask: bool):
        def go():
            k = k_ref[0]                                   # (H, TKV, Dh)
            v = v_ref[0]
            # Batched over all heads at once: no per-head Python-unrolled matmuls.
            s = jnp.einsum("hqd,hkd->hqk", q_scr[...], k,
                           preferred_element_type=jnp.float32)        # (H, TQ, TKV)
            if apply_mask:
                q_pos = qi * tq + jax.lax.broadcasted_iota(jnp.int32, (tq, tkv), 0)
                k_pos = ki * tkv + jax.lax.broadcasted_iota(jnp.int32, (tq, tkv), 1)
                s = jnp.where((k_pos <= q_pos)[None, :, :], s, -jnp.inf)
            m_prev = m_scr[...]                                        # (H, TQ, 1)
            m_new = jnp.maximum(m_prev, jnp.max(s, axis=-1, keepdims=True))
            alpha = jnp.exp(m_prev - m_new)
            p = jnp.exp(s - m_new)                                     # f32
            l_scr[...] = alpha * l_scr[...] + jnp.sum(p, axis=-1, keepdims=True)
            acc_scr[...] = alpha * acc_scr[...] + jnp.einsum(
                "hqk,hkd->hqd", p.astype(cdt), v, preferred_element_type=jnp.float32)
            m_scr[...] = m_new
        return go

    if is_causal:
        q_lo = qi * tq
        q_hi = qi * tq + (tq - 1)
        k_lo = ki * tkv
        k_hi = ki * tkv + (tkv - 1)
        needed = k_lo <= q_hi          # some key visible to some query in this tile
        straddles = k_hi > q_lo        # some key above some query -> mask needed
        # Fully-visible tiles skip the iota/where (EUP/VPU path stays lean).
        pl.when(jnp.logical_and(needed, straddles))(_step(True))
        pl.when(jnp.logical_and(needed, jnp.logical_not(straddles)))(_step(False))
    else:
        _step(False)()

    @pl.when(ki == nk - 1)
    def _finalize():
        inv_l = pl.reciprocal(l_scr[...], approx=True)                 # EUP slot, ~free
        # Normalized per-head context written lane-contiguously into (TQ, C) scratch,
        # then ONE full-contraction output-projection matmul.
        for h in range(num_heads):
            lo = h * head_dim
            ctx_scr[:, lo:lo + head_dim] = (acc_scr[h] * inv_l[h]).astype(cdt)
        y = jnp.dot(ctx_scr[...], wproj_ref[...], preferred_element_type=jnp.float32)
        o_ref[0] = (y + bproj_ref[...]).astype(o_ref.dtype)            # lane-dense (TQ, C)


# --------------------------------------------------------------------------- #
# Wrapper
# --------------------------------------------------------------------------- #

def attention_forward(x, wq, wkv, wproj, bproj, *, num_heads: int,
                      is_causal: bool = False, context=None,
                      q_tile: int = 256, kv_tile: int = 256):
    """Pallas implementation of Attention.forward (self- or cross-attention)."""
    B, N, C = x.shape
    assert C % num_heads == 0, "dim should be divisible by num_heads"
    head_dim = C // num_heads
    scale = head_dim ** -0.5

    ctx = x if context is None else context
    M = ctx.shape[1]

    cdt = x.dtype                           # MXU operand dtype (pass bf16 for bf16 MXU)
    itemsize = jnp.dtype(cdt).itemsize
    mm = _min_sublane_multiple(itemsize)

    # VMEM-aware tile selection (v7x has 64 MiB, v5e/v6e 128 MiB).
    vmem_cap = _vmem_capacity_bytes()
    vmem_limit = max(min(vmem_cap - 16 * 2**20, 100 * 2**20), 32 * 2**20)
    budget = int(0.75 * vmem_limit)

    tq_t, tkv_t = q_tile, kv_tile
    while True:
        TQ = _pick_tile(N, tq_t, itemsize)
        TKV = _pick_tile(M, tkv_t, itemsize)
        fits = _flash_vmem_estimate(TQ, TKV, C, num_heads, head_dim, itemsize) <= budget
        if fits or (tq_t <= 128 and tkv_t <= 128):
            break
        if tkv_t >= tq_t and tkv_t > 128:
            tkv_t //= 2
        else:
            tq_t //= 2

    # v7x megacore balance: keep the "parallel" extent >= 2 so both TCs get work.
    if B * (N // TQ) < 2:
        half = TQ // 2
        if half >= mm and half % mm == 0 and N % half == 0:
            TQ = half

    n_q_tiles = N // TQ
    n_kv_tiles = M // TKV

    # One-time weight preprocessing (outside the kernels, done by XLA once).
    wq_scaled = (wq.astype(jnp.float32) * scale).astype(cdt)   # fold 1/sqrt(Dh) into W_q
    wkv_c = wkv.astype(cdt)
    wproj_c = wproj.astype(cdt)
    bproj_f = bproj.astype(jnp.float32).reshape(1, C)
    x_c = x.astype(cdt)
    ctx_c = ctx.astype(cdt)

    # ---- kernel 1: K/V projection into head-major (B, H, M, Dh) ----
    kv_cost = pl.CostEstimate(
        flops=4 * B * M * C * C,
        transcendentals=0,
        bytes_accessed=itemsize * (3 * B * M * C + 2 * C * C))
    k_heads, v_heads = pl.pallas_call(
        functools.partial(_kv_proj_kernel, num_heads=num_heads, head_dim=head_dim),
        out_shape=(jax.ShapeDtypeStruct((B, num_heads, M, head_dim), cdt),
                   jax.ShapeDtypeStruct((B, num_heads, M, head_dim), cdt)),
        grid_spec=pltpu.PrefetchScalarGridSpec(
            num_scalar_prefetch=0,
            grid=(B, n_kv_tiles),
            in_specs=[
                pl.BlockSpec((1, TKV, C), lambda b, n: (b, n, 0)),
                pl.BlockSpec((C, 2 * C), lambda b, n: (0, 0)),
            ],
            out_specs=(
                pl.BlockSpec((1, num_heads, TKV, head_dim), lambda b, n: (b, 0, n, 0)),
                pl.BlockSpec((1, num_heads, TKV, head_dim), lambda b, n: (b, 0, n, 0)),
            )),
        compiler_params=pltpu.CompilerParams(
            dimension_semantics=("parallel", "parallel"),
            vmem_limit_bytes=vmem_limit),
        cost_estimate=kv_cost,
    )(ctx_c, wkv_c)

    # ---- kernel 2: flash attention ----
    # Causal: clamp the KV block index so steps above the diagonal re-reference the
    # already-resident block (compute is skipped by pl.when, and now the DMA is too).
    if is_causal:
        def kv_map(b, qi, ki):
            last = (qi * TQ + (TQ - 1)) // TKV
            return (b, 0, jnp.minimum(ki, last), 0)
    else:
        def kv_map(b, qi, ki):
            return (b, 0, ki, 0)

    core_flops = 4 * B * N * M * C
    if is_causal:
        core_flops //= 2
    attn_cost = pl.CostEstimate(
        flops=4 * B * N * C * C + core_flops,
        transcendentals=B * num_heads * N * M,
        bytes_accessed=itemsize * (2 * B * N * C + 2 * B * M * C * n_q_tiles
                                   + 2 * C * C) + 4 * C)
    out = pl.pallas_call(
        functools.partial(_flash_attn_kernel, num_heads=num_heads,
                          head_dim=head_dim, is_causal=is_causal),
        out_shape=jax.ShapeDtypeStruct((B, N, C), x.dtype),
        grid_spec=pltpu.PrefetchScalarGridSpec(
            num_scalar_prefetch=0,
            grid=(B, n_q_tiles, n_kv_tiles),
            in_specs=[
                pl.BlockSpec((1, TQ, C), lambda b, qi, ki: (b, qi, 0)),      # x (queries)
                pl.BlockSpec((1, num_heads, TKV, head_dim), kv_map),          # K heads
                pl.BlockSpec((1, num_heads, TKV, head_dim), kv_map),          # V heads
                pl.BlockSpec((C, C), lambda b, qi, ki: (0, 0)),               # W_q * scale
                pl.BlockSpec((C, C), lambda b, qi, ki: (0, 0)),               # W_proj
                pl.BlockSpec((1, C), lambda b, qi, ki: (0, 0)),               # b_proj
            ],
            out_specs=pl.BlockSpec((1, TQ, C), lambda b, qi, ki: (b, qi, 0)),
            scratch_shapes=[
                pltpu.VMEM((num_heads, TQ, head_dim), cdt),          # q (scaled), head-major
                pltpu.VMEM((TQ, C), cdt),                            # q staging / attn context
                pltpu.VMEM((num_heads, TQ, 1), jnp.float32),         # running max  m
                pltpu.VMEM((num_heads, TQ, 1), jnp.float32),         # running denom l
                pltpu.VMEM((num_heads, TQ, head_dim), jnp.float32),  # output accumulator
            ]),
        compiler_params=pltpu.CompilerParams(
            dimension_semantics=("parallel", "parallel", "arbitrary"),
            vmem_limit_bytes=vmem_limit),
        cost_estimate=attn_cost,
    )(x_c, k_heads, v_heads, wq_scaled, wproj_c, bproj_f)
    return out


# --------------------------------------------------------------------------- #
# Pure-JAX reference (mirrors the PyTorch forward)
# --------------------------------------------------------------------------- #

def attention_reference(x, wq, wkv, wproj, bproj, *, num_heads: int,
                        is_causal: bool = False, context=None):
    B, N, C = x.shape
    head_dim = C // num_heads
    scale = head_dim ** -0.5
    ctx = x if context is None else context
    M = ctx.shape[1]

    q = x @ wq
    kv = ctx @ wkv
    k, v = kv[..., :C], kv[..., C:]

    def split(t, L):  # (B, L, C) -> (B, H, L, Dh)
        return t.reshape(B, L, num_heads, head_dim).transpose(0, 2, 1, 3)

    qh, kh, vh = split(q, N), split(k, M), split(v, M)
    s = jnp.einsum("bhnd,bhmd->bhnm", qh, kh) * scale
    if is_causal:
        mask = jnp.tril(jnp.ones((N, M), bool))
        s = jnp.where(mask, s, -jnp.inf)
    p = jax.nn.softmax(s, axis=-1)
    o = jnp.einsum("bhnm,bhmd->bhnd", p, vh)
    o = o.transpose(0, 2, 1, 3).reshape(B, N, C)
    return o @ wproj + bproj.reshape(1, C)


if __name__ == "__main__":
    # Small shapes consistent with the module: dim divisible by num_heads.
    B, N, C = 2, 16, 32
    M_CTX = 24
    NUM_HEADS = 4

    key = jax.random.PRNGKey(0)
    k_x, k_c, k_q, k_kv, k_p, k_b = jax.random.split(key, 6)

    x = jax.random.normal(k_x, (B, N, C), dtype=jnp.float32)
    ctx = jax.random.normal(k_c, (B, M_CTX, C), dtype=jnp.float32)
    wq = 0.02 * jax.random.normal(k_q, (C, C), dtype=jnp.float32)
    wkv = 0.02 * jax.random.normal(k_kv, (C, 2 * C), dtype=jnp.float32)
    wproj = 0.02 * jax.random.normal(k_p, (C, C), dtype=jnp.float32)
    bproj = 0.02 * jax.random.normal(k_b, (1, C), dtype=jnp.float32)

    # Self-attention, causal and non-causal.  Tiny tiles so the test exercises multiple
    # q/kv blocks (online softmax, causal block/DMA skipping, init/finalize phases).
    for causal in (False, True):
        out = attention_forward(x, wq, wkv, wproj, bproj, num_heads=NUM_HEADS,
                                is_causal=causal, q_tile=8, kv_tile=8)
        out = jax.block_until_ready(out)
        ref = attention_reference(x, wq, wkv, wproj, bproj, num_heads=NUM_HEADS,
                                  is_causal=causal)
        assert out.shape == (B, N, C)
        assert jnp.allclose(out, ref, atol=2e-4, rtol=1e-3), \
            f"mismatch vs reference (is_causal={causal})"

    # Cross-attention (context with a different sequence length).
    out = attention_forward(x, wq, wkv, wproj, bproj, num_heads=NUM_HEADS,
                            is_causal=False, context=ctx, q_tile=8, kv_tile=8)
    out = jax.block_until_ready(out)
    ref = attention_reference(x, wq, wkv, wproj, bproj, num_heads=NUM_HEADS,
                              is_causal=False, context=ctx)
    assert out.shape == (B, N, C)
    assert jnp.allclose(out, ref, atol=2e-4, rtol=1e-3), "mismatch vs reference (cross)"

    print("KERNEL_OK")
</pallas_src>

<mosaic_0001>
module attributes {stable_mosaic.version = 11 : i64} {
  func.func @_kv_proj_kernel(%arg0: i32, %arg1: i32, %arg2: memref<1x8x32xf32, #tpu.memory_space<vmem>>, %arg3: memref<32x64xf32, #tpu.memory_space<vmem>>, %arg4: memref<1x4x8x8xf32, #tpu.memory_space<vmem>>, %arg5: memref<1x4x8x8xf32, #tpu.memory_space<vmem>>) attributes {dimension_semantics = [#tpu.dimension_semantics<parallel>, #tpu.dimension_semantics<parallel>], iteration_bounds = array<i64: 2, 2>, scalar_prefetch = 0 : i64, scratch_operands = 0 : i64, tpu.core_type = #tpu.core_type<tc>, window_params = [{transform_indices = @transform_0, window_bounds = array<i64: 1, 8, 32>}, {pipeline_mode = #tpu.pipeline_mode<synchronous>, transform_indices = @transform_1, window_bounds = array<i64: 32, 64>}, {transform_indices = @transform_2, window_bounds = array<i64: 1, 4, 8, 8>}, {transform_indices = @transform_3, window_bounds = array<i64: 1, 4, 8, 8>}]} {
    %c0 = arith.constant 0 : index
    %c0_0 = arith.constant 0 : index
    %c0_1 = arith.constant 0 : index
    %0 = vector.load %arg2[%c0, %c0_0, %c0_1] : memref<1x8x32xf32, #tpu.memory_space<vmem>>, vector<1x8x32xf32>
    %1 = vector.shape_cast %0 : vector<1x8x32xf32> to vector<8x32xf32>
    %c0_2 = arith.constant 0 : index
    %c0_3 = arith.constant 0 : index
    %2 = vector.load %arg3[%c0_2, %c0_3] : memref<32x64xf32, #tpu.memory_space<vmem>>, vector<32x64xf32>
    %cst = arith.constant dense<0.000000e+00> : vector<8x64xf32>
    %3 = tpu.matmul %1, %2, %cst {dimension_numbers = #tpu.dot_dimension_numbers<[1], [0], [0], [1], [0, 0, 1, 1], [], []>} : vector<8x32xf32>, vector<32x64xf32>, vector<8x64xf32> -> vector<8x64xf32>
    %4 = vector.extract_strided_slice %3 {offsets = [0, 0], sizes = [8, 8], strides = [1, 1]} : vector<8x64xf32> to vector<8x8xf32>
    %c0_4 = arith.constant 0 : index
    %c0_5 = arith.constant 0 : index
    %c0_6 = arith.constant 0 : index
    %c0_7 = arith.constant 0 : index
    %5 = vector.load %arg4[%c0_4, %c0_5, %c0_6, %c0_7] : memref<1x4x8x8xf32, #tpu.memory_space<vmem>>, vector<1x1x8x8xf32>
    %6 = vector.shape_cast %5 : vector<1x1x8x8xf32> to vector<8x8xf32>
    %7 = vector.shape_cast %4 : vector<8x8xf32> to vector<1x1x8x8xf32>
    tpu.vector_store %arg4[%c0_4, %c0_5, %c0_6, %c0_7], %7 {strides = array<i32>} : memref<1x4x8x8xf32, #tpu.memory_space<vmem>>, vector<1x1x8x8xf32>,
    %8 = vector.extract_strided_slice %3 {offsets = [0, 32], sizes = [8, 8], strides = [1, 1]} : vector<8x64xf32> to vector<8x8xf32>
    %c0_8 = arith.constant 0 : index
    %c0_9 = arith.constant 0 : index
    %c0_10 = arith.constant 0 : index
    %c0_11 = arith.constant 0 : index
    %9 = vector.load %arg5[%c0_8, %c0_9, %c0_10, %c0_11] : memref<1x4x8x8xf32, #tpu.memory_space<vmem>>, vector<1x1x8x8xf32>
    %10 = vector.shape_cast %9 : vector<1x1x8x8xf32> to vector<8x8xf32>
    %11 = vector.shape_cast %8 : vector<8x8xf32> to vector<1x1x8x8xf32>
    tpu.vector_store %arg5[%c0_8, %c0_9, %c0_10, %c0_11], %11 {strides = array<i32>} : memref<1x4x8x8xf32, #tpu.memory_space<vmem>>, vector<1x1x8x8xf32>,
    %12 = vector.extract_strided_slice %3 {offsets = [0, 8], sizes = [8, 8], strides = [1, 1]} : vector<8x64xf32> to vector<8x8xf32>
    %c0_12 = arith.constant 0 : index
    %c1 = arith.constant 1 : index
    %c0_13 = arith.constant 0 : index
    %c0_14 = arith.constant 0 : index
    %13 = vector.load %arg4[%c0_12, %c1, %c0_13, %c0_14] : memref<1x4x8x8xf32, #tpu.memory_space<vmem>>, vector<1x1x8x8xf32>
    %14 = vector.shape_cast %13 : vector<1x1x8x8xf32> to vector<8x8xf32>
    %15 = vector.shape_cast %12 : vector<8x8xf32> to vector<1x1x8x8xf32>
    tpu.vector_store %arg4[%c0_12, %c1, %c0_13, %c0_14], %15 {strides = array<i32>} : memref<1x4x8x8xf32, #tpu.memory_space<vmem>>, vector<1x1x8x8xf32>,
    %16 = vector.extract_strided_slice %3 {offsets = [0, 40], sizes = [8, 8], strides = [1, 1]} : vector<8x64xf32> to vector<8x8xf32>
    %c0_15 = arith.constant 0 : index
    %c1_16 = arith.constant 1 : index
    %c0_17 = arith.constant 0 : index
    %c0_18 = arith.constant 0 : index
    %17 = vector.load %arg5[%c0_15, %c1_16, %c0_17, %c0_18] : memref<1x4x8x8xf32, #tpu.memory_space<vmem>>, vector<1x1x8x8xf32>
    %18 = vector.shape_cast %17 : vector<1x1x8x8xf32> to vector<8x8xf32>
    %19 = vector.shape_cast %16 : vector<8x8xf32> to vector<1x1x8x8xf32>
    tpu.vector_store %arg5[%c0_15, %c1_16, %c0_17, %c0_18], %19 {strides = array<i32>} : memref<1x4x8x8xf32, #tpu.memory_space<vmem>>, vector<1x1x8x8xf32>,
    %20 = vector.extract_strided_slice %3 {offsets = [0, 16], sizes = [8, 8], strides = [1, 1]} : vector<8x64xf32> to vector<8x8xf32>
    %c0_19 = arith.constant 0 : index
    %c2 = arith.constant 2 : index
    %c0_20 = arith.constant 0 : index
    %c0_21 = arith.constant 0 : index
    %21 = vector.load %arg4[%c0_19, %c2, %c0_20, %c0_21] : memref<1x4x8x8xf32, #tpu.memory_space<vmem>>, vector<1x1x8x8xf32>
    %22 = vector.shape_cast %21 : vector<1x1x8x8xf32> to vector<8x8xf32>
    %23 = vector.shape_cast %20 : vector<8x8xf32> to vector<1x1x8x8xf32>
    tpu.vector_store %arg4[%c0_19, %c2, %c0_20, %c0_21], %23 {strides = array<i32>} : memref<1x4x8x8xf32, #tpu.memory_space<vmem>>, vector<1x1x8x8xf32>,
    %24 = vector.extract_strided_slice %3 {offsets = [0, 48], sizes = [8, 8], strides = [1, 1]} : vector<8x64xf32> to vector<8x8xf32>
    %c0_22 = arith.constant 0 : index
    %c2_23 = arith.constant 2 : index
    %c0_24 = arith.constant 0 : index
    %c0_25 = arith.constant 0 : index
    %25 = vector.load %arg5[%c0_22, %c2_23, %c0_24, %c0_25] : memref<1x4x8x8xf32, #tpu.memory_space<vmem>>, vector<1x1x8x8xf32>
    %26 = vector.shape_cast %25 : vector<1x1x8x8xf32> to vector<8x8xf32>
    %27 = vector.shape_cast %24 : vector<8x8xf32> to vector<1x1x8x8xf32>
    tpu.vector_store %arg5[%c0_22, %c2_23, %c0_24, %c0_25], %27 {strides = array<i32>} : memref<1x4x8x8xf32, #tpu.memory_space<vmem>>, vector<1x1x8x8xf32>,
    %28 = vector.extract_strided_slice %3 {offsets = [0, 24], sizes = [8, 8], strides = [1, 1]} : vector<8x64xf32> to vector<8x8xf32>
    %c0_26 = arith.constant 0 : index
    %c3 = arith.constant 3 : index
    %c0_27 = arith.constant 0 : index
    %c0_28 = arith.constant 0 : index
    %29 = vector.load %arg4[%c0_26, %c3, %c0_27, %c0_28] : memref<1x4x8x8xf32, #tpu.memory_space<vmem>>, vector<1x1x8x8xf32>
    %30 = vector.shape_cast %29 : vector<1x1x8x8xf32> to vector<8x8xf32>
    %31 = vector.shape_cast %28 : vector<8x8xf32> to vector<1x1x8x8xf32>
    tpu.vector_store %arg4[%c0_26, %c3, %c0_27, %c0_28], %31 {strides = array<i32>} : memref<1x4x8x8xf32, #tpu.memory_space<vmem>>, vector<1x1x8x8xf32>,
    %32 = vector.extract_strided_slice %3 {offsets = [0, 56], sizes = [8, 8], strides = [1, 1]} : vector<8x64xf32> to vector<8x8xf32>
    %c0_29 = arith.constant 0 : index
    %c3_30 = arith.constant 3 : index
    %c0_31 = arith.constant 0 : index
    %c0_32 = arith.constant 0 : index
    %33 = vector.load %arg5[%c0_29, %c3_30, %c0_31, %c0_32] : memref<1x4x8x8xf32, #tpu.memory_space<vmem>>, vector<1x1x8x8xf32>
    %34 = vector.shape_cast %33 : vector<1x1x8x8xf32> to vector<8x8xf32>
    %35 = vector.shape_cast %32 : vector<8x8xf32> to vector<1x1x8x8xf32>
    tpu.vector_store %arg5[%c0_29, %c3_30, %c0_31, %c0_32], %35 {strides = array<i32>} : memref<1x4x8x8xf32, #tpu.memory_space<vmem>>, vector<1x1x8x8xf32>,
    return
  }
  func.func @transform_0(%arg0: i32, %arg1: i32) -> (i32, i32, i32) {
    %c0_i32 = arith.constant 0 : i32
    %c0_i32_0 = arith.constant 0 : i32
    return %arg0, %arg1, %c0_i32 : i32, i32, i32
  }
  func.func @transform_1(%arg0: i32, %arg1: i32) -> (i32, i32) {
    %c0_i32 = arith.constant 0 : i32
    %c0_i32_0 = arith.constant 0 : i32
    %c0_i32_1 = arith.constant 0 : i32
    return %c0_i32, %c0_i32_0 : i32, i32
  }
  func.func @transform_2(%arg0: i32, %arg1: i32) -> (i32, i32, i32, i32) {
    %c0_i32 = arith.constant 0 : i32
    %c0_i32_0 = arith.constant 0 : i32
    %c0_i32_1 = arith.constant 0 : i32
    return %arg0, %c0_i32, %arg1, %c0_i32_0 : i32, i32, i32, i32
  }
  func.func @transform_3(%arg0: i32, %arg1: i32) -> (i32, i32, i32, i32) {
    %c0_i32 = arith.constant 0 : i32
    %c0_i32_0 = arith.constant 0 : i32
    %c0_i32_1 = arith.constant 0 : i32
    return %arg0, %c0_i32, %arg1, %c0_i32_0 : i32, i32, i32, i32
  }
}

</mosaic_0001>

<llo_original>
// kernel: tpu_custom_call.1
$region0: #{tpu_custom_call.1}
  #allocation0 [shape = 'u32[]', space=smem, size = 0x4, offset = 0x4, fixed_abs, tag = 'smem constant byte address 0x4 - core index']
  #allocation1 [shape = 'u32[72,128]{1,0:T(1,128)}', space=vmem, size = 0x9000, scoped, tag = 'internal scratch']
  %s0 = inlined_call_operand.hbm [shape: f32[2,16,32], index: 0, kind: input, shape index: {}]
  %s1 = inlined_call_operand.hbm [shape: f32[32,64], index: 1, kind: input, shape index: {}]
  %s2 = inlined_call_operand.vmem [shape: f32[2,4,16,8], index: 2, kind: output, shape index: {0}]
  %s3 = inlined_call_operand.vmem [shape: f32[2,4,16,8], index: 3, kind: output, shape index: {1}]
  %4 = xla_tuple %s2, %s3
  %s5 = sld [smem:[#allocation0]]
  $region125: #{tpu_custom_call.1} parent=0
    _
  %s7 = ssub.s32 1, %s5
  %s8 = scalar_select 0, %s7, %s5
  $region1: #{tpu_custom_call.1} parent=0
    #allocation2 [shape = 'u8[8192]{0}', space=vmem, size = 0x2000, scoped, tag = 'input window, operand 0']
    #allocation3 [shape = 's32[2]{0}', space=sflag, size = 0x8, scoped, tag = 'scoped memory for tpu_custom_call.1']
    #allocation4 [shape = 'u8[16384]{0}', space=vmem, size = 0x4000, scoped, tag = 'input window, operand 1, single buffered']
    #allocation5 [shape = 's32[1]{0}', space=sflag, size = 0x4, scoped, tag = 'scoped memory for tpu_custom_call.1']
    #allocation6 [shape = 'u8[32768]{0}', space=vmem, size = 0x8000, scoped, tag = 'output window, operand 0']
    #allocation7 [shape = 'u8[32768]{0}', space=vmem, size = 0x8000, scoped, tag = 'output window, operand 1']
    %9 = vsyncpa [#allocation3], 0
    %s10 = scalar_lea.sflag [#allocation3], 1
    %11 = vsyncpa %s10, 0
    %12 = vsyncpa [#allocation5], 0
    loop: start=0, step=1, limit=6
    $region2: #{tpu_custom_call.1} parent=1 // loop_pre_header
      _
    $region3: #{tpu_custom_call.1} parent=1 // loop_header
      %s14 = sphi 0, %s18
      %p15 = scmp.ge.s32.totalorder %s14, 6
      %s21 = sphi 0, %s33
      %s22 = sphi 0, %s29
      %s23 = sphi 0, %s21
      %s24 = sphi 0, %s22
      %s25 = sphi 0, %s23
      %s26 = sphi 0, %s24
      %s38 = sphi 0, %s40
      %s41 = sphi 0, %s38
      %s42 = sphi 0, %s41
      %s58 = sphi 0, %s42
      %s62 = sphi 0, %s62
      %s64 = sphi 0, %s62
      %s65 = sphi 0, %s64
      %s79 = sphi 0, %s65
      %s87 = sphi 0, %s89
      %s90 = sphi 0, %s87
      %s91 = sphi 0, %s90
      %s107 = sphi 0, %s91
      %s115 = sphi 0, %s117
      %s118 = sphi 0, %s115
      %s119 = sphi 0, %s118
      %s135 = sphi 0, %s119
    $region4: #{tpu_custom_call.1} parent=1 // loop_header_branch
      %17 = sbr.rel (%p15) target = $region8
    $region5: #{tpu_custom_call.1} parent=1 // loop_body
      %s19 = ssub.s32 %s14, 1
      %s20 = ssub.s32 %s14, 2
      %s27 = sadd.s32 1, %s22
      %p28 = scmp.ge.s32.totalorder %s27, 2
      %s29 = scalar_select %p28, 0, %s27
      %s30 = sadd.s32 1, %s21
      %s31 = scalar_select %p28, %s30, %s21
      %p32 = scmp.ge.s32.totalorder %s31, 2
      %s33 = scalar_select %p32, 0, %s31
      %s34 = ssub.s32 %s21, %s33
      %s35 = ssub.s32 %s22, %s29
      %s36 = sor.u32 %s34, %s35
      %p37 = scmp.eq.s32.totalorder %s36, 0
      %s39 = sadd.s32 %s38, 1
      %s40 = scalar_select %p37, %s38, %s39
      %p43 = pneg %p37
      %p44 = scmp.eq.s32.totalorder %s14, 3
      %p45 = por %p43, %p44
      %p46 = scmp.ne.s32.totalorder %s38, %s41
      %p47 = scmp.eq.s32.totalorder %s14, 0
      %p48 = por %p46, %p47
      %p49 = scmp.ne.s32.totalorder %s38, %s41
      %p50 = scmp.eq.s32.totalorder %s19, 3
      %p51 = por %p49, %p50
      %p52 = scmp.ne.s32.totalorder %s41, %s42
      %p53 = scmp.eq.s32.totalorder %s19, 0
      %p54 = por %p52, %p53
      %p55 = scmp.ne.s32.totalorder %s41, %s42
      %p56 = scmp.eq.s32.totalorder %s20, 3
      %p57 = por %p55, %p56
      %p59 = scmp.ne.s32.totalorder %s42, %s58
      %p60 = scmp.eq.s32.totalorder %s20, 0
      %p61 = por %p59, %p60
      %s63 = sadd.s32 %s62, 1
      %p66 = scmp.eq.s32.totalorder %s14, 3
      %p67 = scmp.ne.s32.totalorder %s62, %s64
      %p68 = scmp.eq.s32.totalorder %s14, 0
      %p69 = por %p67, %p68
      %p70 = scmp.ne.s32.totalorder %s62, %s64
      %p71 = scmp.eq.s32.totalorder %s19, 3
      %p72 = por %p70, %p71
      %p73 = scmp.ne.s32.totalorder %s64, %s65
      %p74 = scmp.eq.s32.totalorder %s19, 0
      %p75 = por %p73, %p74
      %p76 = scmp.ne.s32.totalorder %s64, %s65
      %p77 = scmp.eq.s32.totalorder %s20, 3
      %p78 = por %p76, %p77
      %p80 = scmp.ne.s32.totalorder %s65, %s79
      %p81 = scmp.eq.s32.totalorder %s20, 0
      %p82 = por %p80, %p81
      %s83 = ssub.s32 %s21, %s33
      %s84 = ssub.s32 %s22, %s29
      %s85 = sor.u32 %s83, %s84
      %p86 = scmp.eq.s32.totalorder %s85, 0
      %s88 = sadd.s32 %s87, 1
      %s89 = scalar_select %p86, %s87, %s88
      %p92 = pneg %p86
      %p93 = scmp.eq.s32.totalorder %s14, 3
      %p94 = por %p92, %p93
      %p95 = scmp.ne.s32.totalorder %s87, %s90
      %p96 = scmp.eq.s32.totalorder %s14, 0
      %p97 = por %p95, %p96
      %p98 = scmp.ne.s32.totalorder %s87, %s90
      %p99 = scmp.eq.s32.totalorder %s19, 3
      %p100 = por %p98, %p99
      %p101 = scmp.ne.s32.totalorder %s90, %s91
      %p102 = scmp.eq.s32.totalorder %s19, 0
      %p103 = por %p101, %p102
      %p104 = scmp.ne.s32.totalorder %s90, %s91
      %p105 = scmp.eq.s32.totalorder %s20, 3
      %p106 = por %p104, %p105
      %p108 = scmp.ne.s32.totalorder %s91, %s107
      %p109 = scmp.eq.s32.totalorder %s20, 0
      %p110 = por %p108, %p109
      %s111 = ssub.s32 %s21, %s33
      %s112 = ssub.s32 %s22, %s29
      %s113 = sor.u32 %s111, %s112
      %p114 = scmp.eq.s32.totalorder %s113, 0
      %s116 = sadd.s32 %s115, 1
      %s117 = scalar_select %p114, %s115, %s116
      %p120 = pneg %p114
      %p121 = scmp.eq.s32.totalorder %s14, 3
      %p122 = por %p120, %p121
      %p123 = scmp.ne.s32.totalorder %s115, %s118
      %p124 = scmp.eq.s32.totalorder %s14, 0
      %p125 = por %p123, %p124
      %p126 = scmp.ne.s32.totalorder %s115, %s118
      %p127 = scmp.eq.s32.totalorder %s19, 3
      %p128 = por %p126, %p127
      %p129 = scmp.ne.s32.totalorder %s118, %s119
      %p130 = scmp.eq.s32.totalorder %s19, 0
      %p131 = por %p129, %p130
      %p132 = scmp.ne.s32.totalorder %s118, %s119
      %p133 = scmp.eq.s32.totalorder %s20, 3
      %p134 = por %p132, %p133
      %p136 = scmp.ne.s32.totalorder %s119, %s135
      %p137 = scmp.eq.s32.totalorder %s20, 0
      %p138 = por %p136, %p137
      %p139 = scmp.le.s32.totalorder 1, %s14
      %p140 = scmp.lt.s32.totalorder %s14, 5
      %p141 = pnand %p139, %p140
      %p142 = pneg %p141
      // Predicated region
      $region9: #{tpu_custom_call.1} parent=5 // pred_check
        _
      $region10: #{tpu_custom_call.1} parent=5 // pred_check_branch
        %144 = sbr.rel (%p141) target = $region12
      $region11: #{tpu_custom_call.1} parent=5 // pred_region
        %s145 = ssub.s32 %s14, 1
        // Predicated region
        $region13: #{tpu_custom_call.1} parent=11 // pred_check
          %p146 = pneg %p75
        $region14: #{tpu_custom_call.1} parent=11 // pred_check_branch
          %148 = sbr.rel (%p146) target = $region16
        $region15: #{tpu_custom_call.1} parent=11 // pred_region
          %150 = vsyncadd [#allocation5], 0
          %s151 = sshll.u32 %s1, 4
          %s152 = int_to_ptr.hbm [resolvable:$true] %s151
          %s153 = sshll.u32 [#allocation4], 4
          %s154 = int_to_ptr.vmem [resolvable:$true] %s153
          %159 = dma.hbm_to_vmem [thread:$0]  %s152, 512, %s154, [#allocation5], 128, 128, 8
        $region16: #{tpu_custom_call.1} parent=11 // pred_fallthru
          _
      $region12: #{tpu_custom_call.1} parent=5 // pred_fallthru
        _
      %p160 = scmp.lt.s32.totalorder %s14, 4
      // Predicated region
      $region17: #{tpu_custom_call.1} parent=5 // pred_check
        %p161 = pneg %p160
      $region18: #{tpu_custom_call.1} parent=5 // pred_check_branch
        %163 = sbr.rel (%p161) target = $region20
      $region19: #{tpu_custom_call.1} parent=5 // pred_region
        // Predicated region
        $region21: #{tpu_custom_call.1} parent=19 // pred_check
          %p164 = pneg %p48
        $region22: #{tpu_custom_call.1} parent=19 // pred_check_branch
          %166 = sbr.rel (%p164) target = $region24
        $region23: #{tpu_custom_call.1} parent=19 // pred_region
          %s167 = sand.u32 %s38, 1
          %s168 = scalar_lea.sflag [#allocation3], %s167
          %s169 = sand.u32 %s38, 1
          %s170 = smul.addr %s169, 8
          %s171 = scalar_lea.vmem [#allocation2], %s170
          %173 = vsyncadd %s168, 0
          %s174 = smul.addr %s21, 2
          %s175 = sadd.s32 %s22, %s174
          %s176 = smul.addr %s175, 8
          %s177 = scalar_lea.hbm %s0, %s176
          %s179 = sshll.u32 %s177, 4
          %s180 = int_to_ptr.hbm [resolvable:$true] %s179
          %s181 = sshll.u32 %s171, 4
          %s182 = int_to_ptr.vmem [resolvable:$true] %s181
          %184 = dma.hbm_to_vmem [thread:$0]  %s180, 128, %s182, %s168
        $region24: #{tpu_custom_call.1} parent=19 // pred_fallthru
          _
      $region20: #{tpu_custom_call.1} parent=5 // pred_fallthru
        _
      %p185 = scmp.le.s32.totalorder 1, %s14
      %p186 = scmp.lt.s32.totalorder %s14, 5
      %p187 = pnand %p185, %p186
      %p188 = pneg %p187
      // Predicated region
      $region25: #{tpu_custom_call.1} parent=5 // pred_check
        _
      $region26: #{tpu_custom_call.1} parent=5 // pred_check_branch
        %190 = sbr.rel (%p187) target = $region28
      $region27: #{tpu_custom_call.1} parent=5 // pred_region
        %s191 = ssub.s32 %s14, 1
        %s192 = sand.u32 %s41, 1
        %s193 = scalar_lea.sflag [#allocation3], %s192
        %s194 = sand.u32 %s41, 1
        %s195 = smul.addr %s194, 8
        %s196 = scalar_lea.vmem [#allocation2], %s195
        // Predicated region
        $region29: #{tpu_custom_call.1} parent=27 // pred_check
          %p197 = pneg %p54
        $region30: #{tpu_custom_call.1} parent=27 // pred_check_branch
          %199 = sbr.rel (%p197) target = $region32
        $region31: #{tpu_custom_call.1} parent=27 // pred_region
          %201 = dma.done %s193, 128
        $region32: #{tpu_custom_call.1} parent=27 // pred_fallthru
          _
        // Predicated region
        $region33: #{tpu_custom_call.1} parent=27 // pred_check
          %p202 = pneg %p75
        $region34: #{tpu_custom_call.1} parent=27 // pred_check_branch
          %204 = sbr.rel (%p202) target = $region36
        $region35: #{tpu_custom_call.1} parent=27 // pred_region
          %206 = dma.done [#allocation5], 512
        $region36: #{tpu_custom_call.1} parent=27 // pred_fallthru
          _
        %s207 = sand.u32 %s41, 1
        %s208 = scalar_lea.sflag [#allocation3], %s207
        %s209 = sand.u32 %s41, 1
        %s210 = smul.addr %s209, 8
        %s211 = scalar_lea.vmem [#allocation2], %s210
        %p212 = pneg %p54
        %p213 = pneg %p51
        %p214 = pneg %p75
        %p215 = pneg %p72
        %p216 = pneg %p103
        %p217 = pneg %p100
        %s218 = sand.u32 %s90, 1
        %s219 = sand.u32 %s90, 1
        %s220 = smul.addr %s219, 32
        %s221 = scalar_lea.vmem [#allocation6], %s220
        %p222 = pneg %p131
        %p223 = pneg %p128
        %s224 = sand.u32 %s118, 1
        %s225 = sand.u32 %s118, 1
        %s226 = smul.addr %s225, 32
        %s227 = scalar_lea.vmem [#allocation7], %s226
        %v228 = vld [vmem:[%s196] sm:$0xff]
        %v229 = vld [vmem:[#allocation4] sm:$0xff]
        %v230 = vld [vmem:[#allocation4 + $0x8] sm:$0xff]
        %v231 = vld [vmem:[#allocation4 + $0x10] sm:$0xff]
        %v232 = vld [vmem:[#allocation4 + $0x18] sm:$0xff]
        %vm233 = vcmask 261120
        %v235 = vsel %vm233, %v228, 0
        %237 = vmatpush.msra.mxu0 0.0
        %238 = vmatpush.msra.mxu0 0.0
        %239 = vmatpush.msra.mxu0 0.0
        %240 = vmatpush.msra.mxu0 0.0
        %241 = vmatpush.msra.mxu0 0.0
        %242 = vmatpush.msra.mxu0 0.0
        %243 = vmatpush.msra.mxu0 0.0
        %244 = vmatpush.msra.mxu0 0.0
        %245 = vmatpush.msra.mxu0 0.0
        %246 = vmatpush.msra.mxu0 0.0
        %247 = vmatpush.msra.mxu0 0.0
        %248 = vmatpush.msra.mxu0 0.0
        %249 = vmatpush.msra.mxu0 %v232
        %250 = vmatpush.msra.mxu0 %v231
        %251 = vmatpush.msra.mxu0 %v230
        %252 = vmatpush.msra.mxu0 %v229
        %253 = vmatmul.f32.gmra.mxu0 %v235
        %v254 = vpop.f32.mrf.mxu0
        %v255 = vadd.f32 0.0, %v254
        %256 = vdwg.mxu0
        %vm257 = vcmask 64512
        %258 = vst.msk [vmem:[%s221] sm:$0xff] %vm257, %v255
        %260 = vrot.lane.b32.xlu0 %v255, 96
        %v261 = vpop.permute.xlu0 %260
        %263 = vst.msk [vmem:[%s227] sm:$0xff] %vm257, %v261
        %264 = vrot.lane.b32.xlu0 %v255, 120
        %v265 = vpop.permute.xlu0 %264
        %s267 = scalar_lea.vmem %s221, 8 [#allocation6]
        %268 = vst.msk [vmem:[%s267] sm:$0xff] %vm257, %v265
        %269 = vrot.lane.b32.xlu0 %v255, 88
        %v270 = vpop.permute.xlu0 %269
        %s272 = scalar_lea.vmem %s227, 8 [#allocation7]
        %273 = vst.msk [vmem:[%s272] sm:$0xff] %vm257, %v270
        %274 = vrot.lane.b32.xlu0 %v255, 112
        %v275 = vpop.permute.xlu0 %274
        %s277 = scalar_lea.vmem %s221, 16 [#allocation6]
        %278 = vst.msk [vmem:[%s277] sm:$0xff] %vm257, %v275
        %279 = vrot.lane.b32.xlu0 %v255, 80
        %v280 = vpop.permute.xlu0 %279
        %s282 = scalar_lea.vmem %s227, 16 [#allocation7]
        %283 = vst.msk [vmem:[%s282] sm:$0xff] %vm257, %v280
        %284 = vrot.lane.b32.xlu0 %v255, 104
        %v285 = vpop.permute.xlu0 %284
        %s287 = scalar_lea.vmem %s221, 24 [#allocation6]
        %288 = vst.msk [vmem:[%s287] sm:$0xff] %vm257, %v285
        %289 = vrot.lane.b32.xlu0 %v255, 72
        %v290 = vpop.permute.xlu0 %289
        %s292 = scalar_lea.vmem %s227, 24 [#allocation7]
        %293 = vst.msk [vmem:[%s292] sm:$0xff] %vm257, %v290
        %s294 = sand.u32 %s90, 1
        %s295 = sand.u32 %s90, 1
        %s296 = smul.addr %s295, 32
        %s297 = scalar_lea.vmem [#allocation6], %s296
        %s298 = sand.u32 %s118, 1
        %s299 = sand.u32 %s118, 1
        %s300 = smul.addr %s299, 32
        %s301 = scalar_lea.vmem [#allocation7], %s300
        // Predicated region
        $region37: #{tpu_custom_call.1} parent=27 // pred_check
          %p302 = pneg %p100
        $region38: #{tpu_custom_call.1} parent=27 // pred_check_branch
          %304 = sbr.rel (%p302) target = $region40
        $region39: #{tpu_custom_call.1} parent=27 // pred_region
          %s305 = smul.addr %s23, 8
          %s306 = sadd.s32 %s24, %s305
          %s307 = smul.addr %s306, 8
          %s308 = scalar_lea.vmem %s2, %s307
          // Predicated region
          $region41: #{tpu_custom_call.1} parent=39 // pred_check
            _
          $region42: #{tpu_custom_call.1} parent=39 // pred_check_branch
            %310 = sbr.rel (0) target = $region44
          $region43: #{tpu_custom_call.1} parent=39 // pred_region
            // Predicated region
            $region45: #{tpu_custom_call.1} parent=43 // pred_check
              _
            $region46: #{tpu_custom_call.1} parent=43 // pred_check_branch
              %312 = sbr.rel (0) target = $region48
            $region47: #{tpu_custom_call.1} parent=43 // pred_region
              // Predicated region
              $region60: #{tpu_custom_call.1} parent=47 // pred_check
                _
              $region61: #{tpu_custom_call.1} parent=47 // pred_check_branch
                %334 = sbr.rel (0) target = $region63
              $region62: #{tpu_custom_call.1} parent=47 // pred_region
                loop: start=0, step=1, limit=1
                $region64: #{tpu_custom_call.1} parent=62 // loop_pre_header
                  _
                $region65: #{tpu_custom_call.1} parent=62 // loop_header
                  %s336 = sphi 0, %s340
                  %p337 = scmp.ge.s32.totalorder %s336, 1
                  %s341 = sphi %s297, %s297
                  %s342 = sphi %s308, %s308
                $region66: #{tpu_custom_call.1} parent=62 // loop_header_branch
                  %339 = sbr.rel (%p337) target = $region70
                $region67: #{tpu_custom_call.1} parent=62 // loop_body
                  %v343 = vld [vmem:[%s341] sm:$0xff]
                  %344 = vst [vmem:[%s342] sm:$0xff] %v343
                  %v345 = vld [vmem:[%s341 + $0x8] sm:$0xff]
                  %346 = vst [vmem:[%s342 + $0x10] sm:$0xff] %v345
                  %v347 = vld [vmem:[%s341 + $0x10] sm:$0xff]
                  %348 = vst [vmem:[%s342 + $0x20] sm:$0xff] %v347
                  %v349 = vld [vmem:[%s341 + $0x18] sm:$0xff]
                  %350 = vst [vmem:[%s342 + $0x30] sm:$0xff] %v349
                $region68: #{tpu_custom_call.1} parent=62 // loop_footer
                  %s340 = sadd.s32 1, %s336
                $region69: #{tpu_custom_call.1} parent=62 // loop_footer_branch
                  %335 = sbr.rel target = $region65
                $region70: #{tpu_custom_call.1} parent=62 // loop_exit
                  _
              $region63: #{tpu_custom_call.1} parent=47 // pred_fallthru
                _
              // Predicated region
              $region71: #{tpu_custom_call.1} parent=47 // pred_check
                _
              $region72: #{tpu_custom_call.1} parent=47 // pred_check_branch
                %352 = sbr.rel target = $region74
              $region73: #{tpu_custom_call.1} parent=47 // pred_region
                _
              $region74: #{tpu_custom_call.1} parent=47 // pred_fallthru
                _
            $region48: #{tpu_custom_call.1} parent=43 // pred_fallthru
              _
            // Predicated region
            $region49: #{tpu_custom_call.1} parent=43 // pred_check
              _
            $region50: #{tpu_custom_call.1} parent=43 // pred_check_branch
              %314 = sbr.rel target = $region52
            $region51: #{tpu_custom_call.1} parent=43 // pred_region
              %s316 = ssub.s32 256, 1
              loop: start=0, step=1, limit=1
              $region53: #{tpu_custom_call.1} parent=51 // loop_pre_header
                _
              $region54: #{tpu_custom_call.1} parent=51 // loop_header
                %s318 = sphi 0, %s322
                %p319 = scmp.ge.s32.totalorder %s318, 1
                %s323 = sphi %s297, %s297
                %s324 = sphi %s308, %s308
              $region55: #{tpu_custom_call.1} parent=51 // loop_header_branch
                %321 = sbr.rel (%p319) target = $region59
              $region56: #{tpu_custom_call.1} parent=51 // loop_body
                %v325 = vld [vmem:[%s323] sm:%s316]
                %326 = vst [vmem:[%s324] sm:%s316] %v325
                %v327 = vld [vmem:[%s323 + $0x8] sm:%s316]
                %328 = vst [vmem:[%s324 + $0x10] sm:%s316] %v327
                %v329 = vld [vmem:[%s323 + $0x10] sm:%s316]
                %330 = vst [vmem:[%s324 + $0x20] sm:%s316] %v329
                %v331 = vld [vmem:[%s323 + $0x18] sm:%s316]
                %332 = vst [vmem:[%s324 + $0x30] sm:%s316] %v331
              $region57: #{tpu_custom_call.1} parent=51 // loop_footer
                %s322 = sadd.s32 1, %s318
              $region58: #{tpu_custom_call.1} parent=51 // loop_footer_branch
                %317 = sbr.rel target = $region54
              $region59: #{tpu_custom_call.1} parent=51 // loop_exit
                _
            $region52: #{tpu_custom_call.1} parent=43 // pred_fallthru
              _
          $region44: #{tpu_custom_call.1} parent=39 // pred_fallthru
            _
          %353 = vnop
        $region40: #{tpu_custom_call.1} parent=27 // pred_fallthru
          _
        // Predicated region
        $region75: #{tpu_custom_call.1} parent=27 // pred_check
          %p354 = pneg %p128
        $region76: #{tpu_custom_call.1} parent=27 // pred_check_branch
          %356 = sbr.rel (%p354) target = $region78
        $region77: #{tpu_custom_call.1} parent=27 // pred_region
          %s357 = smul.addr %s23, 8
          %s358 = sadd.s32 %s24, %s357
          %s359 = smul.addr %s358, 8
          %s360 = scalar_lea.vmem %s3, %s359
          // Predicated region
          $region79: #{tpu_custom_call.1} parent=77 // pred_check
            _
          $region80: #{tpu_custom_call.1} parent=77 // pred_check_branch
            %362 = sbr.rel (0) target = $region82
          $region81: #{tpu_custom_call.1} parent=77 // pred_region
            // Predicated region
            $region83: #{tpu_custom_call.1} parent=81 // pred_check
              _
            $region84: #{tpu_custom_call.1} parent=81 // pred_check_branch
              %364 = sbr.rel (0) target = $region86
            $region85: #{tpu_custom_call.1} parent=81 // pred_region
              // Predicated region
              $region98: #{tpu_custom_call.1} parent=85 // pred_check
                _
              $region99: #{tpu_custom_call.1} parent=85 // pred_check_branch
                %386 = sbr.rel (0) target = $region101
              $region100: #{tpu_custom_call.1} parent=85 // pred_region
                loop: start=0, step=1, limit=1
                $region102: #{tpu_custom_call.1} parent=100 // loop_pre_header
                  _
                $region103: #{tpu_custom_call.1} parent=100 // loop_header
                  %s388 = sphi 0, %s392
                  %p389 = scmp.ge.s32.totalorder %s388, 1
                  %s393 = sphi %s301, %s301
                  %s394 = sphi %s360, %s360
                $region104: #{tpu_custom_call.1} parent=100 // loop_header_branch
                  %391 = sbr.rel (%p389) target = $region108
                $region105: #{tpu_custom_call.1} parent=100 // loop_body
                  %v395 = vld [vmem:[%s393] sm:$0xff]
                  %396 = vst [vmem:[%s394] sm:$0xff] %v395
                  %v397 = vld [vmem:[%s393 + $0x8] sm:$0xff]
                  %398 = vst [vmem:[%s394 + $0x10] sm:$0xff] %v397
                  %v399 = vld [vmem:[%s393 + $0x10] sm:$0xff]
                  %400 = vst [vmem:[%s394 + $0x20] sm:$0xff] %v399
                  %v401 = vld [vmem:[%s393 + $0x18] sm:$0xff]
                  %402 = vst [vmem:[%s394 + $0x30] sm:$0xff] %v401
                $region106: #{tpu_custom_call.1} parent=100 // loop_footer
                  %s392 = sadd.s32 1, %s388
                $region107: #{tpu_custom_call.1} parent=100 // loop_footer_branch
                  %387 = sbr.rel target = $region103
                $region108: #{tpu_custom_call.1} parent=100 // loop_exit
                  _
              $region101: #{tpu_custom_call.1} parent=85 // pred_fallthru
                _
              // Predicated region
              $region109: #{tpu_custom_call.1} parent=85 // pred_check
                _
              $region110: #{tpu_custom_call.1} parent=85 // pred_check_branch
                %404 = sbr.rel target = $region112
              $region111: #{tpu_custom_call.1} parent=85 // pred_region
                _
              $region112: #{tpu_custom_call.1} parent=85 // pred_fallthru
                _
            $region86: #{tpu_custom_call.1} parent=81 // pred_fallthru
              _
            // Predicated region
            $region87: #{tpu_custom_call.1} parent=81 // pred_check
              _
            $region88: #{tpu_custom_call.1} parent=81 // pred_check_branch
              %366 = sbr.rel target = $region90
            $region89: #{tpu_custom_call.1} parent=81 // pred_region
              %s368 = ssub.s32 256, 1
              loop: start=0, step=1, limit=1
              $region91: #{tpu_custom_call.1} parent=89 // loop_pre_header
                _
              $region92: #{tpu_custom_call.1} parent=89 // loop_header
                %s370 = sphi 0, %s374
                %p371 = scmp.ge.s32.totalorder %s370, 1
                %s375 = sphi %s301, %s301
                %s376 = sphi %s360, %s360
              $region93: #{tpu_custom_call.1} parent=89 // loop_header_branch
                %373 = sbr.rel (%p371) target = $region97
              $region94: #{tpu_custom_call.1} parent=89 // loop_body
                %v377 = vld [vmem:[%s375] sm:%s368]
                %378 = vst [vmem:[%s376] sm:%s368] %v377
                %v379 = vld [vmem:[%s375 + $0x8] sm:%s368]
                %380 = vst [vmem:[%s376 + $0x10] sm:%s368] %v379
                %v381 = vld [vmem:[%s375 + $0x10] sm:%s368]
                %382 = vst [vmem:[%s376 + $0x20] sm:%s368] %v381
                %v383 = vld [vmem:[%s375 + $0x18] sm:%s368]
                %384 = vst [vmem:[%s376 + $0x30] sm:%s368] %v383
              $region95: #{tpu_custom_call.1} parent=89 // loop_footer
                %s374 = sadd.s32 1, %s370
              $region96: #{tpu_custom_call.1} parent=89 // loop_footer_branch
                %369 = sbr.rel target = $region92
              $region97: #{tpu_custom_call.1} parent=89 // loop_exit
                _
            $region90: #{tpu_custom_call.1} parent=81 // pred_fallthru
              _
          $region82: #{tpu_custom_call.1} parent=77 // pred_fallthru
            _
          %405 = vnop
        $region78: #{tpu_custom_call.1} parent=27 // pred_fallthru
          _
      $region28: #{tpu_custom_call.1} parent=5 // pred_fallthru
        _
      %p406 = scmp.le.s32.totalorder 2, %s14
      // Predicated region
      $region113: #{tpu_custom_call.1} parent=5 // pred_check
        %p407 = pneg %p406
      $region114: #{tpu_custom_call.1} parent=5 // pred_check_branch
        %409 = sbr.rel (%p407) target = $region116
      $region115: #{tpu_custom_call.1} parent=5 // pred_region
        %s410 = ssub.s32 %s14, 2
        // Predicated region
        $region117: #{tpu_custom_call.1} parent=115 // pred_check
          %p411 = pneg %p106
        $region118: #{tpu_custom_call.1} parent=115 // pred_check_branch
          %413 = sbr.rel (%p411) target = $region120
        $region119: #{tpu_custom_call.1} parent=115 // pred_region
          %s414 = sand.u32 %s91, 1
          %s415 = sand.u32 %s91, 1
          %s416 = smul.addr %s415, 32
          %s417 = scalar_lea.vmem [#allocation6], %s416
        $region120: #{tpu_custom_call.1} parent=115 // pred_fallthru
          _
        // Predicated region
        $region121: #{tpu_custom_call.1} parent=115 // pred_check
          %p418 = pneg %p134
        $region122: #{tpu_custom_call.1} parent=115 // pred_check_branch
          %420 = sbr.rel (%p418) target = $region124
        $region123: #{tpu_custom_call.1} parent=115 // pred_region
          %s421 = sand.u32 %s119, 1
          %s422 = sand.u32 %s119, 1
          %s423 = smul.addr %s422, 32
          %s424 = scalar_lea.vmem [#allocation7], %s423
        $region124: #{tpu_custom_call.1} parent=115 // pred_fallthru
          _
      $region116: #{tpu_custom_call.1} parent=5 // pred_fallthru
        _
    $region6: #{tpu_custom_call.1} parent=1 // loop_footer
      %s18 = sadd.s32 1, %s14
    $region7: #{tpu_custom_call.1} parent=1 // loop_footer_branch
      %13 = sbr.rel target = $region3
    $region8: #{tpu_custom_call.1} parent=1 // loop_exit
      _
    %425 = vsyncpa [#allocation3], 1
    %s426 = scalar_lea.sflag [#allocation3], 1
    %427 = vsyncpa %s426, 1
    %428 = vsyncpa [#allocation5], 1

</llo_original>
